<compile_context>
chip_gen: v6e
topology: v6e:2x2x1
jax: 0.10.0
libtpu: 0.0.40
codegen_flags: <defaults>
</compile_context>

<pallas_src>
import functools

import jax
import jax.numpy as jnp
from jax.experimental import pallas as pl
from jax.experimental.pallas import tpu as pltpu


def _se_ca_kernel(x_ref, w1t_ref, w2t_ref, o_ref, acc_ref, *, inv_hw):
    # x_ref   : (n_tile, C, hw_tile)  current spatial slab (lane axis = HW)
    # w1t_ref : (C, C//r)             first Linear weight, pre-transposed
    # w2t_ref : (C//r, C)             second Linear weight, pre-transposed
    # o_ref   : (n_tile, C)           attention weights (written on last HW step)
    # acc_ref : (n_tile, C) f32       running spatial sum, persists across HW steps
    hw_step = pl.program_id(1)

    @pl.when(hw_step == 0)
    def _():
        acc_ref[...] = jnp.zeros_like(acc_ref)

    # Streaming spatial reduction: pure XLU lane-reduce that hides under the
    # x DMA.  Accumulate in f32 without materializing a full-tile upcast.
    acc_ref[...] += jnp.sum(x_ref[...], axis=-1, dtype=jnp.float32)

    @pl.when(hw_step == pl.num_programs(1) - 1)
    def _():
        pooled = acc_ref[...] * inv_hw                                   # (n, C)
        # Tiny MLP runs once per batch tile (negligible vs the HBM read of x).
        h = jnp.dot(pooled, w1t_ref[...], preferred_element_type=jnp.float32)
        h = jnp.maximum(h, 0.0)                                          # ReLU
        y = jnp.dot(h, w2t_ref[...], preferred_element_type=jnp.float32)
        o_ref[...] = jax.nn.sigmoid(y).astype(o_ref.dtype)               # Sigmoid


def se_ca_forward(x, w1, w2, *, hw_tile=None, n_tile=None,
                  vmem_limit_bytes=48 * 1024 * 1024):
    """SE channel attention.

    x : (N, C, H, W); w1 : (C//r, C); w2 : (C, C//r)  (PyTorch (out, in) layout)
    Returns sigmoid(relu(mean_hw(x) @ w1.T) @ w2.T), shape (N, C).
    """
    n, c, h, w = x.shape
    hw = h * w

    # Batch tiling: leading dim of x is unconstrained, but the (n_tile, C)
    # output block needs n_tile % 8 == 0 or n_tile == N.
    if n_tile is None:
        n_tile = 8 if (n > 8 and n % 8 == 0) else n
    assert n % n_tile == 0 and (n_tile == n or n_tile % 8 == 0)

    # Spatial (reduction) tiling along the lane axis.
    if hw_tile is None:
        # Largest multiple of 128 keeping the double-buffered x slab well inside
        # VMEM on every generation (v7x: 64 MiB physical; v5e/v6e: 128 MiB).
        budget = 8 * 1024 * 1024  # bytes per pipeline buffer of x
        per_lane_col = n_tile * c * x.dtype.itemsize
        hw_tile = max(128, (budget // max(per_lane_col, 1)) // 128 * 128)

    x_flat = x.reshape(n, c, hw)  # free reshape: spatial collapsed onto lanes
    if hw <= hw_tile:
        hw_tile = hw              # single full-extent block (always legal)
    else:
        hw_tile = max(128, (hw_tile // 128) * 128)
        hw_pad = pl.cdiv(hw, hw_tile) * hw_tile
        if hw_pad != hw:
            # Zero-pad the ragged tail tile: zeros are exact for the spatial
            # *sum*; the mean divides by the true H*W inside the kernel.
            x_flat = jnp.pad(x_flat, ((0, 0), (0, 0), (0, hw_pad - hw)))

    hw_padded = x_flat.shape[-1]
    grid = (n // n_tile, hw_padded // hw_tile)

    # Pre-transpose the tiny weights (free) so the kernel's matmuls consume the
    # PyTorch (out, in) layout without an in-kernel XLU transpose.
    w1t = jnp.transpose(w1)   # (C, C//r)
    w2t = jnp.transpose(w2)   # (C//r, C)

    kernel = functools.partial(_se_ca_kernel, inv_hw=1.0 / float(hw))

    return pl.pallas_call(
        kernel,
        out_shape=jax.ShapeDtypeStruct((n, c), x.dtype),
        grid_spec=pltpu.PrefetchScalarGridSpec(
            num_scalar_prefetch=0,
            grid=grid,
            in_specs=[
                pl.BlockSpec((n_tile, c, hw_tile), lambda i, j: (i, 0, j)),
                pl.BlockSpec(w1t.shape, lambda i, j: (0, 0)),
                pl.BlockSpec(w2t.shape, lambda i, j: (0, 0)),
            ],
            out_specs=pl.BlockSpec((n_tile, c), lambda i, j: (i, 0)),
            scratch_shapes=[pltpu.VMEM((n_tile, c), jnp.float32)],
        ),
        compiler_params=pltpu.CompilerParams(
            dimension_semantics=("parallel", "arbitrary"),
            vmem_limit_bytes=vmem_limit_bytes,
        ),
    )(x_flat, w1t, w2t)


def _ref_forward(x, w1, w2):
    pooled = jnp.mean(x, axis=(2, 3))
    h = jnp.maximum(pooled @ w1.T, 0.0)
    return jax.nn.sigmoid(h @ w2.T)


if __name__ == "__main__":
    # Small shapes consistent with the module: channels divisible by reduction=12.
    N, C, reduction = 2, 24, 12
    hidden = C // reduction  # 2

    key = jax.random.PRNGKey(0)
    kx, k1, k2, kx2 = jax.random.split(key, 4)

    # PyTorch Linear weight layout: (out_features, in_features).
    w1 = jax.random.normal(k1, (hidden, C), dtype=jnp.float32) * 0.1
    w2 = jax.random.normal(k2, (C, hidden), dtype=jnp.float32) * 0.1

    # Case 1: HW = 256, hw_tile = 128 -> exercises the 2-step streaming
    # reduction (accumulator init / finalize under pl.when).
    x1 = jax.random.normal(kx, (N, C, 16, 16), dtype=jnp.float32)
    out1 = jax.block_until_ready(se_ca_forward(x1, w1, w2, hw_tile=128))
    ref1 = _ref_forward(x1, w1, w2)
    assert out1.shape == (N, C)
    assert jnp.allclose(out1, ref1, atol=1e-5, rtol=1e-5)

    # Case 2: HW = 400, hw_tile = 128 -> exercises the zero-padded ragged tail.
    x2 = jax.random.normal(kx2, (N, C, 20, 20), dtype=jnp.float32)
    out2 = jax.block_until_ready(se_ca_forward(x2, w1, w2, hw_tile=128))
    ref2 = _ref_forward(x2, w1, w2)
    assert jnp.allclose(out2, ref2, atol=1e-5, rtol=1e-5)

    # Case 3: default auto tile (single full-extent HW block at these sizes).
    out3 = jax.block_until_ready(se_ca_forward(x1, w1, w2))
    assert jnp.allclose(out3, ref1, atol=1e-5, rtol=1e-5)

    print("KERNEL_OK")
</pallas_src>

<mosaic_0001>
module attributes {stable_mosaic.version = 11 : i64} {
  func.func @_se_ca_kernel(%arg0: i32, %arg1: i32, %arg2: memref<2x24x128xf32, #tpu.memory_space<vmem>>, %arg3: memref<24x2xf32, #tpu.memory_space<vmem>>, %arg4: memref<2x24xf32, #tpu.memory_space<vmem>>, %arg5: memref<2x24xf32, #tpu.memory_space<vmem>>, %arg6: memref<2x24xf32, #tpu.memory_space<vmem>>) attributes {dimension_semantics = [#tpu.dimension_semantics<parallel>, #tpu.dimension_semantics<arbitrary>], iteration_bounds = array<i64: 1, 2>, scalar_prefetch = 0 : i64, scratch_operands = 1 : i64, tpu.core_type = #tpu.core_type<tc>, window_params = [{transform_indices = @transform_0, window_bounds = array<i64: 2, 24, 128>}, {pipeline_mode = #tpu.pipeline_mode<synchronous>, transform_indices = @transform_1, window_bounds = array<i64: 24, 2>}, {pipeline_mode = #tpu.pipeline_mode<synchronous>, transform_indices = @transform_2, window_bounds = array<i64: 2, 24>}, {transform_indices = @transform_3, window_bounds = array<i64: 2, 24>}]} {
    %c0_i32 = arith.constant 0 : i32
    %0 = arith.cmpi eq, %arg1, %c0_i32 : i32
    %1 = arith.extui %0 : i1 to i32
    %c0_i32_0 = arith.constant 0 : i32
    %2 = arith.cmpi ne, %1, %c0_i32_0 : i32
    scf.if %2 {
      %cst_8 = arith.constant 0.000000e+00 : f32
      %11 = vector.broadcast %cst_8 : f32 to vector<2x24xf32>
      %c0_9 = arith.constant 0 : index
      %c0_10 = arith.constant 0 : index
      %12 = vector.load %arg6[%c0_9, %c0_10] : memref<2x24xf32, #tpu.memory_space<vmem>>, vector<2x24xf32>
      tpu.vector_store %arg6[%c0_9, %c0_10], %11 {strides = array<i32>} : memref<2x24xf32, #tpu.memory_space<vmem>>, vector<2x24xf32>,
    } else {
    }
    %c0 = arith.constant 0 : index
    %c0_1 = arith.constant 0 : index
    %3 = vector.load %arg6[%c0, %c0_1] : memref<2x24xf32, #tpu.memory_space<vmem>>, vector<2x24xf32>
    %c0_2 = arith.constant 0 : index
    %c0_3 = arith.constant 0 : index
    %c0_4 = arith.constant 0 : index
    %4 = vector.load %arg2[%c0_2, %c0_3, %c0_4] : memref<2x24x128xf32, #tpu.memory_space<vmem>>, vector<2x24x128xf32>
    %cst = arith.constant dense<0.000000e+00> : vector<2x24xf32>
    %5 = vector.multi_reduction <add>, %4, %cst [2] : vector<2x24x128xf32> to vector<2x24xf32>
    %6 = arith.addf %3, %5 : vector<2x24xf32>
    %c0_5 = arith.constant 0 : index
    %c0_6 = arith.constant 0 : index
    %7 = vector.load %arg6[%c0_5, %c0_6] : memref<2x24xf32, #tpu.memory_space<vmem>>, vector<2x24xf32>
    tpu.vector_store %arg6[%c0_5, %c0_6], %6 {strides = array<i32>} : memref<2x24xf32, #tpu.memory_space<vmem>>, vector<2x24xf32>,
    %c1_i32 = arith.constant 1 : i32
    %8 = arith.cmpi eq, %arg1, %c1_i32 : i32
    %9 = arith.extui %8 : i1 to i32
    %c0_i32_7 = arith.constant 0 : i32
    %10 = arith.cmpi ne, %9, %c0_i32_7 : i32
    scf.if %10 {
      %c0_8 = arith.constant 0 : index
      %c0_9 = arith.constant 0 : index
      %11 = vector.load %arg6[%c0_8, %c0_9] : memref<2x24xf32, #tpu.memory_space<vmem>>, vector<2x24xf32>
      %cst_10 = arith.constant 3.906250e-03 : f32
      %12 = vector.broadcast %cst_10 : f32 to vector<2x24xf32>
      %13 = arith.mulf %11, %12 : vector<2x24xf32>
      %c0_11 = arith.constant 0 : index
      %c0_12 = arith.constant 0 : index
      %14 = vector.load %arg3[%c0_11, %c0_12] : memref<24x2xf32, #tpu.memory_space<vmem>>, vector<24x2xf32>
      %cst_13 = arith.constant dense<0.000000e+00> : vector<2x2xf32>
      %15 = tpu.matmul %13, %14, %cst_13 {dimension_numbers = #tpu.dot_dimension_numbers<[1], [0], [0], [1], [0, 0, 1, 1], [], []>} : vector<2x24xf32>, vector<24x2xf32>, vector<2x2xf32> -> vector<2x2xf32>
      %cst_14 = arith.constant 0.000000e+00 : f32
      %16 = vector.broadcast %cst_14 : f32 to vector<2x2xf32>
      %17 = arith.maximumf %15, %16 : vector<2x2xf32>
      %c0_15 = arith.constant 0 : index
      %c0_16 = arith.constant 0 : index
      %18 = vector.load %arg4[%c0_15, %c0_16] : memref<2x24xf32, #tpu.memory_space<vmem>>, vector<2x24xf32>
      %cst_17 = arith.constant dense<0.000000e+00> : vector<2x24xf32>
      %19 = tpu.matmul %17, %18, %cst_17 {dimension_numbers = #tpu.dot_dimension_numbers<[1], [0], [0], [1], [0, 0, 1, 1], [], []>} : vector<2x2xf32>, vector<2x24xf32>, vector<2x24xf32> -> vector<2x24xf32>
      %20 = arith.negf %19 : vector<2x24xf32>
      %21 = math.exp %20 : vector<2x24xf32>
      %cst_18 = arith.constant 1.000000e+00 : f32
      %22 = vector.broadcast %cst_18 : f32 to vector<2x24xf32>
      %23 = arith.addf %22, %21 : vector<2x24xf32>
      %24 = arith.divf %22, %23 : vector<2x24xf32>
      %c0_19 = arith.constant 0 : index
      %c0_20 = arith.constant 0 : index
      %25 = vector.load %arg5[%c0_19, %c0_20] : memref<2x24xf32, #tpu.memory_space<vmem>>, vector<2x24xf32>
      tpu.vector_store %arg5[%c0_19, %c0_20], %24 {strides = array<i32>} : memref<2x24xf32, #tpu.memory_space<vmem>>, vector<2x24xf32>,
    } else {
    }
    return
  }
  func.func @transform_0(%arg0: i32, %arg1: i32) -> (i32, i32, i32) {
    %c0_i32 = arith.constant 0 : i32
    %c0_i32_0 = arith.constant 0 : i32
    return %arg0, %c0_i32, %arg1 : i32, i32, i32
  }
  func.func @transform_1(%arg0: i32, %arg1: i32) -> (i32, i32) {
    %c0_i32 = arith.constant 0 : i32
    %c0_i32_0 = arith.constant 0 : i32
    %c0_i32_1 = arith.constant 0 : i32
    return %c0_i32, %c0_i32_0 : i32, i32
  }
  func.func @transform_2(%arg0: i32, %arg1: i32) -> (i32, i32) {
    %c0_i32 = arith.constant 0 : i32
    %c0_i32_0 = arith.constant 0 : i32
    %c0_i32_1 = arith.constant 0 : i32
    return %c0_i32, %c0_i32_0 : i32, i32
  }
  func.func @transform_3(%arg0: i32, %arg1: i32) -> (i32, i32) {
    %c0_i32 = arith.constant 0 : i32
    %c0_i32_0 = arith.constant 0 : i32
    return %arg0, %c0_i32 : i32, i32
  }
}

</mosaic_0001>

<llo_original>
// kernel: tpu_custom_call.1
$region0: #{tpu_custom_call.1}
  #allocation0 [shape = 'u32[]', space=smem, size = 0x4, offset = 0x4, fixed_abs, tag = 'smem constant byte address 0x4 - core index']
  #allocation1 [shape = 'u32[144,128]{1,0:T(1,128)}', space=vmem, size = 0x12000, scoped, tag = 'internal scratch']
  #allocation2 [shape = 'f32[2,24]{1,0:T(2,128)}', space=vmem, size = 0x400, scoped, tag = 'scratch operand']
  %s0 = inlined_call_operand.hbm [shape: f32[2,24,256], index: 0, kind: input, shape index: {}]
  %s1 = inlined_call_operand.vmem [shape: f32[24,2], index: 1, kind: input, shape index: {}]
  %s2 = inlined_call_operand.vmem [shape: f32[2,24], index: 2, kind: input, shape index: {}]
  %s3 = inlined_call_operand.hbm [shape: f32[2,24], index: 3, kind: output, shape index: {}]
  %s4 = sld [smem:[#allocation0]]
  $region57: #{tpu_custom_call.1} parent=0
    _
  %s6 = ssub.s32 1, %s4
  %s7 = scalar_select 0, %s6, %s4
  $region1: #{tpu_custom_call.1} parent=0
    #allocation3 [shape = 'u8[49152]{0}', space=vmem, size = 0xc000, scoped, tag = 'input window, operand 0']
    #allocation4 [shape = 's32[2]{0}', space=sflag, size = 0x8, scoped, tag = 'scoped memory for tpu_custom_call.1']
    #allocation5 [shape = 's32[2]{0}', space=sflag, size = 0x8, scoped, tag = 'scoped memory for tpu_custom_call.1']
    #allocation6 [shape = 'u8[1024]{0}', space=vmem, size = 0x400, scoped, tag = 'output window, operand 0, single buffered']
    %8 = vsyncpa [#allocation4], 0
    %s9 = scalar_lea.sflag [#allocation4], 1
    %10 = vsyncpa %s9, 0
    %11 = vsyncpa [#allocation5], 0
    loop: start=0, step=1, limit=4
    $region2: #{tpu_custom_call.1} parent=1 // loop_pre_header
      _
    $region3: #{tpu_custom_call.1} parent=1 // loop_header
      %s13 = sphi 0, %s17
      %p14 = scmp.ge.s32.totalorder %s13, 4
      %s20 = sphi 0, %s32
      %s21 = sphi 0, %s28
      %s22 = sphi 0, %s20
      %s23 = sphi 0, %s21
      %s24 = sphi 0, %s22
      %s25 = sphi 0, %s23
      %s37 = sphi 0, %s39
      %s40 = sphi 0, %s37
      %s41 = sphi 0, %s40
      %s57 = sphi 0, %s41
      %s61 = sphi 0, %s61
      %s63 = sphi 0, %s61
      %s64 = sphi 0, %s63
      %s78 = sphi 0, %s64
      %s82 = sphi 0, %s82
      %s84 = sphi 0, %s82
      %s85 = sphi 0, %s84
      %s99 = sphi 0, %s85
      %s105 = sphi 0, %s107
      %s108 = sphi 0, %s105
      %s109 = sphi 0, %s108
      %s125 = sphi 0, %s109
    $region4: #{tpu_custom_call.1} parent=1 // loop_header_branch
      %16 = sbr.rel (%p14) target = $region8
    $region5: #{tpu_custom_call.1} parent=1 // loop_body
      %s18 = ssub.s32 %s13, 1
      %s19 = ssub.s32 %s13, 2
      %s26 = sadd.s32 1, %s21
      %p27 = scmp.ge.s32.totalorder %s26, 2
      %s28 = scalar_select %p27, 0, %s26
      %s29 = sadd.s32 1, %s20
      %s30 = scalar_select %p27, %s29, %s20
      %p31 = scmp.ge.s32.totalorder %s30, 1
      %s32 = scalar_select %p31, 0, %s30
      %s33 = ssub.s32 %s20, %s32
      %s34 = ssub.s32 %s21, %s28
      %s35 = sor.u32 %s33, %s34
      %p36 = scmp.eq.s32.totalorder %s35, 0
      %s38 = sadd.s32 %s37, 1
      %s39 = scalar_select %p36, %s37, %s38
      %p42 = pneg %p36
      %p43 = scmp.eq.s32.totalorder %s13, 1
      %p44 = por %p42, %p43
      %p45 = scmp.ne.s32.totalorder %s37, %s40
      %p46 = scmp.eq.s32.totalorder %s13, 0
      %p47 = por %p45, %p46
      %p48 = scmp.ne.s32.totalorder %s37, %s40
      %p49 = scmp.eq.s32.totalorder %s18, 1
      %p50 = por %p48, %p49
      %p51 = scmp.ne.s32.totalorder %s40, %s41
      %p52 = scmp.eq.s32.totalorder %s18, 0
      %p53 = por %p51, %p52
      %p54 = scmp.ne.s32.totalorder %s40, %s41
      %p55 = scmp.eq.s32.totalorder %s19, 1
      %p56 = por %p54, %p55
      %p58 = scmp.ne.s32.totalorder %s41, %s57
      %p59 = scmp.eq.s32.totalorder %s19, 0
      %p60 = por %p58, %p59
      %s62 = sadd.s32 %s61, 1
      %p65 = scmp.eq.s32.totalorder %s13, 1
      %p66 = scmp.ne.s32.totalorder %s61, %s63
      %p67 = scmp.eq.s32.totalorder %s13, 0
      %p68 = por %p66, %p67
      %p69 = scmp.ne.s32.totalorder %s61, %s63
      %p70 = scmp.eq.s32.totalorder %s18, 1
      %p71 = por %p69, %p70
      %p72 = scmp.ne.s32.totalorder %s63, %s64
      %p73 = scmp.eq.s32.totalorder %s18, 0
      %p74 = por %p72, %p73
      %p75 = scmp.ne.s32.totalorder %s63, %s64
      %p76 = scmp.eq.s32.totalorder %s19, 1
      %p77 = por %p75, %p76
      %p79 = scmp.ne.s32.totalorder %s64, %s78
      %p80 = scmp.eq.s32.totalorder %s19, 0
      %p81 = por %p79, %p80
      %s83 = sadd.s32 %s82, 1
      %p86 = scmp.eq.s32.totalorder %s13, 1
      %p87 = scmp.ne.s32.totalorder %s82, %s84
      %p88 = scmp.eq.s32.totalorder %s13, 0
      %p89 = por %p87, %p88
      %p90 = scmp.ne.s32.totalorder %s82, %s84
      %p91 = scmp.eq.s32.totalorder %s18, 1
      %p92 = por %p90, %p91
      %p93 = scmp.ne.s32.totalorder %s84, %s85
      %p94 = scmp.eq.s32.totalorder %s18, 0
      %p95 = por %p93, %p94
      %p96 = scmp.ne.s32.totalorder %s84, %s85
      %p97 = scmp.eq.s32.totalorder %s19, 1
      %p98 = por %p96, %p97
      %p100 = scmp.ne.s32.totalorder %s85, %s99
      %p101 = scmp.eq.s32.totalorder %s19, 0
      %p102 = por %p100, %p101
      %s103 = ssub.s32 %s20, %s32
      %p104 = scmp.eq.s32.totalorder %s103, 0
      %s106 = sadd.s32 %s105, 1
      %s107 = scalar_select %p104, %s105, %s106
      %p110 = pneg %p104
      %p111 = scmp.eq.s32.totalorder %s13, 1
      %p112 = por %p110, %p111
      %p113 = scmp.ne.s32.totalorder %s105, %s108
      %p114 = scmp.eq.s32.totalorder %s13, 0
      %p115 = por %p113, %p114
      %p116 = scmp.ne.s32.totalorder %s105, %s108
      %p117 = scmp.eq.s32.totalorder %s18, 1
      %p118 = por %p116, %p117
      %p119 = scmp.ne.s32.totalorder %s108, %s109
      %p120 = scmp.eq.s32.totalorder %s18, 0
      %p121 = por %p119, %p120
      %p122 = scmp.ne.s32.totalorder %s108, %s109
      %p123 = scmp.eq.s32.totalorder %s19, 1
      %p124 = por %p122, %p123
      %p126 = scmp.ne.s32.totalorder %s109, %s125
      %p127 = scmp.eq.s32.totalorder %s19, 0
      %p128 = por %p126, %p127
      %p129 = scmp.le.s32.totalorder 1, %s13
      %p130 = scmp.lt.s32.totalorder %s13, 3
      %p131 = pnand %p129, %p130
      %p132 = pneg %p131
      // Predicated region
      $region9: #{tpu_custom_call.1} parent=5 // pred_check
        _
      $region10: #{tpu_custom_call.1} parent=5 // pred_check_branch
        %134 = sbr.rel (%p131) target = $region12
      $region11: #{tpu_custom_call.1} parent=5 // pred_region
        %s135 = ssub.s32 %s13, 1
        // Predicated region
        $region13: #{tpu_custom_call.1} parent=11 // pred_check
          %p136 = pneg %p74
        $region14: #{tpu_custom_call.1} parent=11 // pred_check_branch
          %138 = sbr.rel (%p136) target = $region16
        $region15: #{tpu_custom_call.1} parent=11 // pred_region
          _
        $region16: #{tpu_custom_call.1} parent=11 // pred_fallthru
          _
        // Predicated region
        $region17: #{tpu_custom_call.1} parent=11 // pred_check
          %p139 = pneg %p95
        $region18: #{tpu_custom_call.1} parent=11 // pred_check_branch
          %141 = sbr.rel (%p139) target = $region20
        $region19: #{tpu_custom_call.1} parent=11 // pred_region
          _
        $region20: #{tpu_custom_call.1} parent=11 // pred_fallthru
          _
      $region12: #{tpu_custom_call.1} parent=5 // pred_fallthru
        _
      %p142 = scmp.lt.s32.totalorder %s13, 2
      // Predicated region
      $region21: #{tpu_custom_call.1} parent=5 // pred_check
        %p143 = pneg %p142
      $region22: #{tpu_custom_call.1} parent=5 // pred_check_branch
        %145 = sbr.rel (%p143) target = $region24
      $region23: #{tpu_custom_call.1} parent=5 // pred_region
        // Predicated region
        $region25: #{tpu_custom_call.1} parent=23 // pred_check
          %p146 = pneg %p47
        $region26: #{tpu_custom_call.1} parent=23 // pred_check_branch
          %148 = sbr.rel (%p146) target = $region28
        $region27: #{tpu_custom_call.1} parent=23 // pred_region
          %s149 = sand.u32 %s37, 1
          %s150 = scalar_lea.sflag [#allocation4], %s149
          %s151 = sand.u32 %s37, 1
          %s152 = smul.addr %s151, 48
          %s153 = scalar_lea.vmem [#allocation3], %s152
          %s154 = smul.u32 2, %s20
          %s156 = ssub.s32 768, 768
          %157 = vsyncadd %s150, %s156
          %s158 = smul.addr %s154, 6
          %s159 = sadd.s32 %s21, %s158
          %s160 = smul.addr %s159, 128
          %s161 = scalar_lea.hbm %s0, %s160
          %s162 = sshll.u32 %s153, 4
          %s163 = int_to_ptr.vmem [resolvable:$true] %s162
          %168 = dma.hbm_to_vmem [thread:$0]  %s161, 768, %s163, %s150, 256, 128, 8
        $region28: #{tpu_custom_call.1} parent=23 // pred_fallthru
          _
      $region24: #{tpu_custom_call.1} parent=5 // pred_fallthru
        _
      %p169 = scmp.le.s32.totalorder 1, %s13
      %p170 = scmp.lt.s32.totalorder %s13, 3
      %p171 = pnand %p169, %p170
      %p172 = pneg %p171
      // Predicated region
      $region29: #{tpu_custom_call.1} parent=5 // pred_check
        _
      $region30: #{tpu_custom_call.1} parent=5 // pred_check_branch
        %174 = sbr.rel (%p171) target = $region32
      $region31: #{tpu_custom_call.1} parent=5 // pred_region
        %s175 = ssub.s32 %s13, 1
        %s176 = sand.u32 %s40, 1
        %s177 = scalar_lea.sflag [#allocation4], %s176
        %s178 = sand.u32 %s40, 1
        %s179 = smul.addr %s178, 48
        %s180 = scalar_lea.vmem [#allocation3], %s179
        // Predicated region
        $region33: #{tpu_custom_call.1} parent=31 // pred_check
          %p181 = pneg %p53
        $region34: #{tpu_custom_call.1} parent=31 // pred_check_branch
          %183 = sbr.rel (%p181) target = $region36
        $region35: #{tpu_custom_call.1} parent=31 // pred_region
          %184 = dma.done %s177, 768
        $region36: #{tpu_custom_call.1} parent=31 // pred_fallthru
          _
        %s185 = sand.u32 %s40, 1
        %s186 = scalar_lea.sflag [#allocation4], %s185
        %s187 = sand.u32 %s40, 1
        %s188 = smul.addr %s187, 48
        %s189 = scalar_lea.vmem [#allocation3], %s188
        %p190 = pneg %p53
        %p191 = pneg %p50
        %p192 = pneg %p74
        %p193 = pneg %p71
        %p194 = pneg %p95
        %p195 = pneg %p92
        %p196 = pneg %p121
        %p197 = pneg %p118
        %s198 = smul.u32 2, %s22
        %p199 = scmp.eq.s32.totalorder %s23, 0
        // Predicated region
        $region37: #{tpu_custom_call.1} parent=31 // pred_check
          %p200 = pneg %p199
        $region38: #{tpu_custom_call.1} parent=31 // pred_check_branch
          %202 = sbr.rel (%p200) target = $region40
        $region39: #{tpu_custom_call.1} parent=31 // pred_region
          %vm203 = vcmask 189440
          %204 = vst.msk [vmem:[#allocation2] sm:$0x3] %vm203, 0.0
        $region40: #{tpu_custom_call.1} parent=31 // pred_fallthru
          _
        %v205 = vld [vmem:[#allocation2] sm:$0x3]
        %v206 = vld [vmem:[%s180] sm:$0xff]
        %v207 = vld [vmem:[%s180 + $0x8] sm:$0xff]
        %v208 = vld [vmem:[%s180 + $0x10] sm:$0xff]
        %v209 = vld [vmem:[%s180 + $0x18] sm:$0xff]
        %v210 = vld [vmem:[%s180 + $0x20] sm:$0xff]
        %v211 = vld [vmem:[%s180 + $0x28] sm:$0xff]
        %212 = vadd.xlane.f32.xlu0 %v206
        %v213 = vpop.xlane.xlu0 %212
        %214 = vadd.xlane.f32.xlu0 %v207
        %v215 = vpop.xlane.xlu0 %214
        %216 = vadd.xlane.f32.xlu0 %v208
        %v217 = vpop.xlane.xlu0 %216
        %218 = vadd.xlane.f32.xlu0 %v209
        %v219 = vpop.xlane.xlu0 %218
        %220 = vadd.xlane.f32.xlu0 %v210
        %v221 = vpop.xlane.xlu0 %220
        %222 = vadd.xlane.f32.xlu0 %v211
        %v223 = vpop.xlane.xlu0 %222
        %v230 = vlaneseq
        %v231 = vand.u32 %v230, 127
        %v232 = vlaneseq
        %v233 = vshrl.u32 %v232, 7
        %v234 = vsub.s32 %v231, %v233
        %v235 = vrot.slane %v213, %v234
        %v236 = vadd.s32 %v231, 4294967288
        %v237 = vlaneseq
        %v238 = vshrl.u32 %v237, 7
        %v239 = vsub.s32 %v236, %v238
        %v240 = vrot.slane %v215, %v239
        %vm241 = vcmask 130112
        %v242 = vsel %vm241, %v240, %v235
        %v243 = vadd.s32 %v231, 4294967280
        %v244 = vlaneseq
        %v245 = vshrl.u32 %v244, 7
        %v246 = vsub.s32 %v243, %v245
        %v247 = vrot.slane %v217, %v246
        %vm248 = vcmask 195712
        %v249 = vsel %vm248, %v247, %v242
        %v250 = vlaneseq
        %v251 = vshrl.u32 %v250, 7
        %v252 = vsub.s32 %v231, %v251
        %v253 = vrot.slane %v219, %v252
        %v254 = vlaneseq
        %v255 = vshrl.u32 %v254, 7
        %v256 = vsub.s32 %v236, %v255
        %v257 = vrot.slane %v221, %v256
        %v258 = vsel %vm241, %v257, %v253
        %v259 = vlaneseq
        %v260 = vshrl.u32 %v259, 7
        %v261 = vsub.s32 %v243, %v260
        %v262 = vrot.slane %v223, %v261
        %v263 = vsel %vm248, %v262, %v258
        %vm264 = vcmask 1041409
        %v265 = vsel %vm264, %v263, %v249
        %v267 = vadd.f32 %v205, %v265
        %vm268 = vcmask 189440
        %269 = vst.msk [vmem:[#allocation2] sm:$0x3] %vm268, %v267
        %p270 = scmp.eq.s32.totalorder %s23, 1
        // Predicated region
        $region41: #{tpu_custom_call.1} parent=31 // pred_check
          %p271 = pneg %p270
        $region42: #{tpu_custom_call.1} parent=31 // pred_check_branch
          %273 = sbr.rel (%p271) target = $region44
        $region43: #{tpu_custom_call.1} parent=31 // pred_region
          %v274 = vld [vmem:[#allocation2] sm:$0x3]
          %v275 = vmul.f32 %v274, 0.00390625
          %v276 = vld [vmem:[%s1] sm:$0xff]
          %v277 = vld [vmem:[%s1 + $0x8] sm:$0xff]
          %v278 = vld [vmem:[%s1 + $0x10] sm:$0xff]
          %vm279 = vcmask 195584
          %v281 = vsel %vm279, %v275, 0
          %283 = vmatprep.subr.mxu0 0.0
          %284 = vmatpush1.msra.mxu0 0.0
          %285 = vmatprep.subr.mxu0 0.0
          %286 = vmatpush1.msra.mxu0 0.0
          %287 = vmatprep.subr.mxu0 0.0
          %288 = vmatpush1.msra.mxu0 0.0
          %289 = vmatprep.subr.mxu0 0.0
          %290 = vmatpush1.msra.mxu0 0.0
          %291 = vmatprep.subr.mxu0 0.0
          %292 = vmatpush1.msra.mxu0 0.0
          %293 = vmatprep.subr.mxu0 0.0
          %294 = vmatpush1.msra.mxu0 0.0
          %295 = vmatprep.subr.mxu0 0.0
          %296 = vmatpush1.msra.mxu0 0.0
          %297 = vmatprep.subr.mxu0 0.0
          %298 = vmatpush1.msra.mxu0 0.0
          %299 = vmatprep.subr.mxu0 0.0
          %300 = vmatpush1.msra.mxu0 0.0
          %301 = vmatprep.subr.mxu0 0.0
          %302 = vmatpush1.msra.mxu0 0.0
          %303 = vmatprep.subr.mxu0 0.0
          %304 = vmatpush1.msra.mxu0 0.0
          %305 = vmatprep.subr.mxu0 0.0
          %306 = vmatpush1.msra.mxu0 0.0
          %307 = vmatprep.subr.mxu0 0.0
          %308 = vmatpush1.msra.mxu0 0.0
          %309 = vmatprep.subr.mxu0 0.0
          %310 = vmatpush1.msra.mxu0 %v278
          %311 = vmatprep.subr.mxu0 0.0
          %312 = vmatpush1.msra.mxu0 %v277
          %313 = vmatprep.subr.mxu0 0.0
          %314 = vmatpush1.msra.mxu0 %v276
          %315 = vmatprep.subr.mxu0 0.0
          %316 = vmatpush2.msra.mxu0 0.0
          %317 = vmatprep.subr.mxu0 0.0
          %318 = vmatpush2.msra.mxu0 0.0
          %319 = vmatprep.subr.mxu0 0.0
          %320 = vmatpush2.msra.mxu0 0.0
          %321 = vmatprep.subr.mxu0 0.0
          %322 = vmatpush2.msra.mxu0 0.0
          %323 = vmatprep.subr.mxu0 0.0
          %324 = vmatpush2.msra.mxu0 0.0
          %325 = vmatprep.subr.mxu0 0.0
          %326 = vmatpush2.msra.mxu0 0.0
          %327 = vmatprep.subr.mxu0 0.0
          %328 = vmatpush2.msra.mxu0 0.0
          %329 = vmatprep.subr.mxu0 0.0
          %330 = vmatpush2.msra.mxu0 0.0
          %331 = vmatprep.subr.mxu0 0.0
          %332 = vmatpush2.msra.mxu0 0.0
          %333 = vmatprep.subr.mxu0 0.0
          %334 = vmatpush2.msra.mxu0 0.0
          %335 = vmatprep.subr.mxu0 0.0
          %336 = vmatpush2.msra.mxu0 0.0
          %337 = vmatprep.subr.mxu0 0.0
          %338 = vmatpush2.msra.mxu0 0.0
          %339 = vmatprep.subr.mxu0 0.0
          %340 = vmatpush2.msra.mxu0 0.0
          %341 = vmatprep.subr.mxu0 0.0
          %342 = vmatpush2.msra.mxu0 0.0
          %343 = vmatprep.subr.mxu0 0.0
          %344 = vmatpush2.msra.mxu0 0.0
          %345 = vmatprep.subr.mxu0 0.0
          %346 = vmatpush2.msra.mxu0 0.0
          %347 = vmatprep.mubr.f32.mxu0 0.0
          %348 = vmatmul.mubr.f32.gmra.mxu0 %v281
          %v349 = vpop.f32.mrf.mxu0
          %v350 = vadd.f32 0.0, %v349
          %v351 = vpop.f32.mrf.mxu0
          %352 = vdwg.mxu0
          %v353 = vmax.f32 %v350, 0.0
          %v354 = vld [vmem:[%s2] sm:$0x3]
          %vm355 = vcmask 15360
          %v357 = vsel %vm355, %v353, 0
          %vm359 = vcmask 1041408
          %v361 = vsel %vm359, %v354, 0
          %363 = vmatprep.subr.mxu0 0.0
          %364 = vmatpush1.msra.mxu0 0.0
          %365 = vmatprep.subr.mxu0 0.0
          %366 = vmatpush1.msra.mxu0 0.0
          %367 = vmatprep.subr.mxu0 0.0
          %368 = vmatpush1.msra.mxu0 0.0
          %369 = vmatprep.subr.mxu0 0.0
          %370 = vmatpush1.msra.mxu0 0.0
          %371 = vmatprep.subr.mxu0 0.0
          %372 = vmatpush1.msra.mxu0 0.0
          %373 = vmatprep.subr.mxu0 0.0
          %374 = vmatpush1.msra.mxu0 0.0
          %375 = vmatprep.subr.mxu0 0.0
          %376 = vmatpush1.msra.mxu0 0.0
          %377 = vmatprep.subr.mxu0 0.0
          %378 = vmatpush1.msra.mxu0 0.0
          %379 = vmatprep.subr.mxu0 0.0
          %380 = vmatpush1.msra.mxu0 0.0
          %381 = vmatprep.subr.mxu0 0.0
          %382 = vmatpush1.msra.mxu0 0.0
          %383 = vmatprep.subr.mxu0 0.0
          %384 = vmatpush1.msra.mxu0 0.0
          %385 = vmatprep.subr.mxu0 0.0
          %386 = vmatpush1.msra.mxu0 0.0
          %387 = vmatprep.subr.mxu0 0.0
          %388 = vmatpush1.msra.mxu0 0.0
          %389 = vmatprep.subr.mxu0 0.0
          %390 = vmatpush1.msra.mxu0 0.0
          %391 = vmatprep.subr.mxu0 0.0
          %392 = vmatpush1.msra.mxu0 0.0
          %393 = vmatprep.subr.mxu0 0.0
          %394 = vmatpush1.msra.mxu0 %v361
          %395 = vmatprep.subr.mxu0 0.0
          %396 = vmatpush2.msra.mxu0 0.0
          %397 = vmatprep.subr.mxu0 0.0
          %398 = vmatpush2.msra.mxu0 0.0
          %399 = vmatprep.subr.mxu0 0.0
          %400 = vmatpush2.msra.mxu0 0.0
          %401 = vmatprep.subr.mxu0 0.0
          %402 = vmatpush2.msra.mxu0 0.0
          %403 = vmatprep.subr.mxu0 0.0
          %404 = vmatpush2.msra.mxu0 0.0
          %405 = vmatprep.subr.mxu0 0.0
          %406 = vmatpush2.msra.mxu0 0.0
          %407 = vmatprep.subr.mxu0 0.0
          %408 = vmatpush2.msra.mxu0 0.0
          %409 = vmatprep.subr.mxu0 0.0
          %410 = vmatpush2.msra.mxu0 0.0
          %411 = vmatprep.subr.mxu0 0.0
          %412 = vmatpush2.msra.mxu0 0.0
          %413 = vmatprep.subr.mxu0 0.0
          %414 = vmatpush2.msra.mxu0 0.0
          %415 = vmatprep.subr.mxu0 0.0
          %416 = vmatpush2.msra.mxu0 0.0
          %417 = vmatprep.subr.mxu0 0.0
          %418 = vmatpush2.msra.mxu0 0.0
          %419 = vmatprep.subr.mxu0 0.0
          %420 = vmatpush2.msra.mxu0 0.0
          %421 = vmatprep.subr.mxu0 0.0
          %422 = vmatpush2.msra.mxu0 0.0
          %423 = vmatprep.subr.mxu0 0.0
          %424 = vmatpush2.msra.mxu0 0.0
          %425 = vmatprep.subr.mxu0 0.0
          %426 = vmatpush2.msra.mxu0 0.0
          %427 = vmatprep.mubr.f32.mxu0 0.0
          %428 = vmatmul.mubr.f32.gmra.mxu0 %v357
          %v429 = vpop.f32.mrf.mxu0
          %v430 = vadd.f32 0.0, %v429
          %v431 = vpop.f32.mrf.mxu0
          %432 = vdwg.mxu0
          %v433 = vxor.u32 %v430, 2147483648
          %v434 = vmul.f32 %v433, 1.442695
          %v435 = vpow.pop %v434
          %v436 = vadd.f32 %v435, 1.0
          %v437 = vrcp.pop %v436
          %v438 = vmul.f32 1.0, %v437
          %439 = vst.msk [vmem:[#allocation6] sm:$0x3] %vm268, %v438
        $region44: #{tpu_custom_call.1} parent=31 // pred_fallthru
          _
        // Predicated region
        $region45: #{tpu_custom_call.1} parent=31 // pred_check
          %p440 = pneg %p118
        $region46: #{tpu_custom_call.1} parent=31 // pred_check_branch
          %442 = sbr.rel (%p440) target = $region48
        $region47: #{tpu_custom_call.1} parent=31 // pred_region
          %s444 = ssub.s32 32, 32
          %445 = vsyncadd [#allocation5], %s444
          %s446 = smul.addr %s22, 32
          %s447 = scalar_lea.hbm %s3, %s446
          %s449 = sshll.u32 [#allocation6], 4
          %s450 = int_to_ptr.vmem [resolvable:$true] %s449
          %452 = dma.vmem_to_hbm [thread:$0]  %s450, 32, %s447, [#allocation5]
        $region48: #{tpu_custom_call.1} parent=31 // pred_fallthru
          _
        // Predicated region
        $region49: #{tpu_custom_call.1} parent=31 // pred_check
          %p453 = pneg %p118
        $region50: #{tpu_custom_call.1} parent=31 // pred_check_branch
          %455 = sbr.rel (%p453) target = $region52
        $region51: #{tpu_custom_call.1} parent=31 // pred_region
          %456 = dma.done [#allocation5], 32
        $region52: #{tpu_custom_call.1} parent=31 // pred_fallthru
          _
      $region32: #{tpu_custom_call.1} parent=5 // pred_fallthru
        _
      %p457 = scmp.le.s32.totalorder 2, %s13
      // Predicated region
      $region53: #{tpu_custom_call.1} parent=5 // pred_check
        %p458 = pneg %p457
      $region54: #{tpu_custom_call.1} parent=5 // pred_check_branch
        %460 = sbr.rel (%p458) target = $region56
      $region55: #{tpu_custom_call.1} parent=5 // pred_region
        %s461 = ssub.s32 %s13, 2
      $region56: #{tpu_custom_call.1} parent=5 // pred_fallthru
        _
    $region6: #{tpu_custom_call.1} parent=1 // loop_footer
      %s17 = sadd.s32 1, %s13
    $region7: #{tpu_custom_call.1} parent=1 // loop_footer_branch
      %12 = sbr.rel target = $region3
    $region8: #{tpu_custom_call.1} parent=1 // loop_exit
      _
    %462 = vsyncpa [#allocation4], 1
    %s463 = scalar_lea.sflag [#allocation4], 1
    %464 = vsyncpa %s463, 1
    %465 = vsyncpa [#allocation5], 1
    %s466 = scalar_lea.sflag [#allocation5], 1
    %467 = vsyncpa %s466, 1

</llo_original>
